<compile_context>
chip_gen: v7x
topology: tpu7x:2x2x1
jax: 0.10.0
libtpu: 0.0.40
codegen_flags: <defaults>
</compile_context>

<pallas_src>
import numpy as np
import jax
import jax.numpy as jnp
from jax.experimental import pallas as pl
from jax.experimental.pallas import tpu as pltpu

OUT_SIZE = 112                    # F.interpolate(..., size=112)
OUT2 = OUT_SIZE * OUT_SIZE        # 12544
EMB_DIM = 128                     # synthetic embedding dim (multiple of 128)


# ---------------------------------------------------------------------------
# Bilinear interpolation matrix (PyTorch align_corners=False semantics).
# ---------------------------------------------------------------------------
def _bilinear_matrix(out_size: int, in_size: int) -> np.ndarray:
    scale = in_size / out_size
    i = np.arange(out_size, dtype=np.float64)
    src = (i + 0.5) * scale - 0.5
    src = np.maximum(src, 0.0)                      # PyTorch clamps negative src
    j0 = np.minimum(np.floor(src).astype(np.int64), in_size - 1)
    lam = np.clip(src - j0, 0.0, 1.0)
    j1 = np.minimum(j0 + 1, in_size - 1)
    mat = np.zeros((out_size, in_size), dtype=np.float32)
    rows = np.arange(out_size)
    np.add.at(mat, (rows, j0), (1.0 - lam).astype(np.float32))
    np.add.at(mat, (rows, j1), lam.astype(np.float32))
    return mat


def _kron_resize_matrix(H: int, W: int) -> np.ndarray:
    """M[h_in*W + w_in, h_out*112 + w_out] = Ah[h_out,h_in] * Aw[w_out,w_in]."""
    ah = _bilinear_matrix(OUT_SIZE, H)              # (112, H)
    aw = _bilinear_matrix(OUT_SIZE, W)              # (112, W)
    return np.kron(ah, aw).T.astype(np.float32)     # (H*W, 12544)


# ---------------------------------------------------------------------------
# One-time weight preprocessing: fold the bilinear resize into the net weights.
#   W_fold[c*H*W + hw, e] = sum_o  M[hw, o] * W[c*12544 + o, e]
# Valid because both the resize and the (synthetic) linear net are linear maps
# whose weights do not change between calls.
# ---------------------------------------------------------------------------
def fold_resize_into_weights(w: jax.Array, C: int, H: int, W: int) -> jax.Array:
    E = w.shape[1]
    assert w.shape[0] == C * OUT2
    m = jnp.asarray(_kron_resize_matrix(H, W))                    # (HW, 12544)
    wr = w.astype(jnp.float32).reshape(C, OUT2, E)                # (C, 12544, E)
    wf = jnp.einsum('ko,coe->cke', m, wr)                         # (C, HW, E)
    return wf.reshape(C * H * W, E)                               # (C*HW, E)


# ---------------------------------------------------------------------------
# Fused kernel:  K-tiled embedding contraction  +  normalize / cosine / L1.
#   grid = (kt,) "arbitrary";  acc (2B, E) is VMEM-resident across the grid.
# ---------------------------------------------------------------------------
def _arcface_fused_kernel(x_ref, w_ref, o_ref, acc_ref):
    k = pl.program_id(0)

    @pl.when(k == 0)
    def _():
        acc_ref[...] = jnp.zeros_like(acc_ref)

    # Partial embedding for this K-slice: (2B, tk) @ (tk, E) on the MXU.
    # (Default precision; pass precision=jax.lax.Precision.HIGHEST if bit-level
    #  parity with a PyTorch f32 reference is required.)
    acc_ref[...] += jnp.dot(x_ref[...], w_ref[...],
                            preferred_element_type=jnp.float32)

    @pl.when(k == pl.num_programs(0) - 1)
    def _():
        emb = acc_ref[...]                          # (2B, E)
        nb = emb.shape[0] // 2
        ef = emb[:nb]                               # fake embeddings (B, E)
        eg = emb[nb:]                               # gt   embeddings (B, E)
        eps = jnp.float32(1e-12)                    # F.normalize eps
        nf = jnp.maximum(jnp.sqrt(jnp.sum(ef * ef, axis=-1, keepdims=True)), eps)
        ng = jnp.maximum(jnp.sqrt(jnp.sum(eg * eg, axis=-1, keepdims=True)), eps)
        inner = jnp.sum((ef / nf) * (eg / ng), axis=-1, keepdims=True)   # (B, 1)
        abs_diff = jnp.abs(jnp.float32(1.0) - inner)                     # |1 - cos|
        loss = jnp.sum(abs_diff) / jnp.float32(nb)                       # L1 mean
        o_ref[...] = jnp.reshape(loss, (1, 1))


# ---------------------------------------------------------------------------
# Wrapper (hot path): single pallas_call, scalar loss out.
# ---------------------------------------------------------------------------
def arcface_loss(fake: jax.Array, gt: jax.Array, w_fold: jax.Array) -> jax.Array:
    """fake, gt: (B, C, H, W) float32;  w_fold: (C*H*W, E) float32 (pre-folded)."""
    assert fake.shape == gt.shape
    B, C, H, W = fake.shape
    HW = H * W
    K, E = w_fold.shape
    assert K == C * HW

    # Contraction tiling: one channel per grid step when lane-aligned,
    # otherwise the whole K axis in one step (full-dim block is always legal).
    if C > 1 and HW % 128 == 0:
        tk, kt = HW, C
    else:
        tk, kt = K, 1
        # TODO(synk): lane-padded K tiling for large, non-128-aligned H*W.

    # fake/gt concatenated along batch -> one input stream, one accumulator.
    x_flat = jnp.concatenate([fake, gt], axis=0).astype(jnp.float32)
    x_flat = x_flat.reshape(2 * B, K)                       # (2B, C*HW)

    loss = pl.pallas_call(
        _arcface_fused_kernel,
        out_shape=jax.ShapeDtypeStruct((1, 1), jnp.float32),
        grid_spec=pltpu.PrefetchScalarGridSpec(
            num_scalar_prefetch=0,
            grid=(kt,),
            in_specs=[
                pl.BlockSpec((2 * B, tk), lambda k: (0, k)),
                pl.BlockSpec((tk, E), lambda k: (k, 0)),
            ],
            out_specs=pl.BlockSpec((1, 1), lambda k: (0, 0)),
            scratch_shapes=[pltpu.VMEM((2 * B, E), jnp.float32)],
        ),
        compiler_params=pltpu.CompilerParams(
            dimension_semantics=("arbitrary",),
        ),
    )(x_flat, w_fold)
    return loss[0, 0]


if __name__ == "__main__":
    # Small deterministic example: batch=2, 3-channel 16x16 images.
    B, C, H, W = 2, 3, 16, 16
    key = jax.random.PRNGKey(0)
    kf, kg, kw = jax.random.split(key, 3)

    fake = jax.random.normal(kf, (B, C, H, W), dtype=jnp.float32)
    gt = jax.random.normal(kg, (B, C, H, W), dtype=jnp.float32)

    # Deterministic synthetic "net" weights (flatten -> linear embedding).
    D = C * OUT2
    w = jax.random.normal(kw, (D, EMB_DIM), dtype=jnp.float32) * jnp.float32(0.02)

    # One-time weight preprocessing (resize fold) — outside the hot path.
    w_fold = jax.block_until_ready(fold_resize_into_weights(w, C, H, W))

    loss = arcface_loss(fake, gt, w_fold)
    jax.block_until_ready(loss)
    print("KERNEL_OK")
</pallas_src>

<mosaic_0001>
module attributes {stable_mosaic.version = 11 : i64} {
  func.func @_arcface_fused_kernel(%arg0: i32, %arg1: memref<4x256xf32, #tpu.memory_space<vmem>>, %arg2: memref<256x128xf32, #tpu.memory_space<vmem>>, %arg3: memref<1x1xf32, #tpu.memory_space<vmem>>, %arg4: memref<4x128xf32, #tpu.memory_space<vmem>>) attributes {dimension_semantics = [#tpu.dimension_semantics<arbitrary>], iteration_bounds = array<i64: 3>, scalar_prefetch = 0 : i64, scratch_operands = 1 : i64, tpu.core_type = #tpu.core_type<tc>, window_params = [{transform_indices = @transform_0, window_bounds = array<i64: 4, 256>}, {transform_indices = @transform_1, window_bounds = array<i64: 256, 128>}, {pipeline_mode = #tpu.pipeline_mode<synchronous>, transform_indices = @transform_2, window_bounds = array<i64: 1, 1>}]} {
    %c0_i32 = arith.constant 0 : i32
    %0 = arith.cmpi eq, %arg0, %c0_i32 : i32
    %1 = arith.extui %0 : i1 to i32
    %c0_i32_0 = arith.constant 0 : i32
    %2 = arith.cmpi ne, %1, %c0_i32_0 : i32
    scf.if %2 {
      %cst_9 = arith.constant 0.000000e+00 : f32
      %12 = vector.broadcast %cst_9 : f32 to vector<4x128xf32>
      %c0_10 = arith.constant 0 : index
      %c0_11 = arith.constant 0 : index
      %13 = vector.load %arg4[%c0_10, %c0_11] : memref<4x128xf32, #tpu.memory_space<vmem>>, vector<4x128xf32>
      tpu.vector_store %arg4[%c0_10, %c0_11], %12 {strides = array<i32>} : memref<4x128xf32, #tpu.memory_space<vmem>>, vector<4x128xf32>,
    } else {
    }
    %c0 = arith.constant 0 : index
    %c0_1 = arith.constant 0 : index
    %3 = vector.load %arg4[%c0, %c0_1] : memref<4x128xf32, #tpu.memory_space<vmem>>, vector<4x128xf32>
    %c0_2 = arith.constant 0 : index
    %c0_3 = arith.constant 0 : index
    %4 = vector.load %arg1[%c0_2, %c0_3] : memref<4x256xf32, #tpu.memory_space<vmem>>, vector<4x256xf32>
    %c0_4 = arith.constant 0 : index
    %c0_5 = arith.constant 0 : index
    %5 = vector.load %arg2[%c0_4, %c0_5] : memref<256x128xf32, #tpu.memory_space<vmem>>, vector<256x128xf32>
    %cst = arith.constant dense<0.000000e+00> : vector<4x128xf32>
    %6 = tpu.matmul %4, %5, %cst {dimension_numbers = #tpu.dot_dimension_numbers<[1], [0], [0], [1], [0, 0, 1, 1], [], []>} : vector<4x256xf32>, vector<256x128xf32>, vector<4x128xf32> -> vector<4x128xf32>
    %7 = arith.addf %3, %6 : vector<4x128xf32>
    %c0_6 = arith.constant 0 : index
    %c0_7 = arith.constant 0 : index
    %8 = vector.load %arg4[%c0_6, %c0_7] : memref<4x128xf32, #tpu.memory_space<vmem>>, vector<4x128xf32>
    tpu.vector_store %arg4[%c0_6, %c0_7], %7 {strides = array<i32>} : memref<4x128xf32, #tpu.memory_space<vmem>>, vector<4x128xf32>,
    %c2_i32 = arith.constant 2 : i32
    %9 = arith.cmpi eq, %arg0, %c2_i32 : i32
    %10 = arith.extui %9 : i1 to i32
    %c0_i32_8 = arith.constant 0 : i32
    %11 = arith.cmpi ne, %10, %c0_i32_8 : i32
    scf.if %11 {
      %c0_9 = arith.constant 0 : index
      %c0_10 = arith.constant 0 : index
      %12 = vector.load %arg4[%c0_9, %c0_10] : memref<4x128xf32, #tpu.memory_space<vmem>>, vector<4x128xf32>
      %13 = vector.extract_strided_slice %12 {offsets = [0, 0], sizes = [2, 128], strides = [1, 1]} : vector<4x128xf32> to vector<2x128xf32>
      %14 = vector.extract_strided_slice %12 {offsets = [2, 0], sizes = [2, 128], strides = [1, 1]} : vector<4x128xf32> to vector<2x128xf32>
      %15 = arith.mulf %13, %13 : vector<2x128xf32>
      %cst_11 = arith.constant dense<0.000000e+00> : vector<2xf32>
      %16 = vector.multi_reduction <add>, %15, %cst_11 [1] : vector<2x128xf32> to vector<2xf32>
      %17 = vector.shape_cast %16 : vector<2xf32> to vector<2x1xf32>
      %18 = math.sqrt %17 : vector<2x1xf32>
      %cst_12 = arith.constant 9.99999996E-13 : f32
      %19 = vector.broadcast %cst_12 : f32 to vector<2x1xf32>
      %20 = arith.maximumf %18, %19 : vector<2x1xf32>
      %21 = arith.mulf %14, %14 : vector<2x128xf32>
      %cst_13 = arith.constant dense<0.000000e+00> : vector<2xf32>
      %22 = vector.multi_reduction <add>, %21, %cst_13 [1] : vector<2x128xf32> to vector<2xf32>
      %23 = vector.shape_cast %22 : vector<2xf32> to vector<2x1xf32>
      %24 = math.sqrt %23 : vector<2x1xf32>
      %cst_14 = arith.constant 9.99999996E-13 : f32
      %25 = vector.broadcast %cst_14 : f32 to vector<2x1xf32>
      %26 = arith.maximumf %24, %25 : vector<2x1xf32>
      %27 = vector.broadcast %20 : vector<2x1xf32> to vector<2x128xf32>
      %28 = arith.divf %13, %27 : vector<2x128xf32>
      %29 = vector.broadcast %26 : vector<2x1xf32> to vector<2x128xf32>
      %30 = arith.divf %14, %29 : vector<2x128xf32>
      %31 = arith.mulf %28, %30 : vector<2x128xf32>
      %cst_15 = arith.constant dense<0.000000e+00> : vector<2xf32>
      %32 = vector.multi_reduction <add>, %31, %cst_15 [1] : vector<2x128xf32> to vector<2xf32>
      %33 = vector.shape_cast %32 : vector<2xf32> to vector<2x1xf32>
      %cst_16 = arith.constant 1.000000e+00 : f32
      %34 = vector.broadcast %cst_16 : f32 to vector<2x1xf32>
      %35 = arith.subf %34, %33 : vector<2x1xf32>
      %36 = math.absf %35 : vector<2x1xf32>
      %37 = vector.shape_cast %36 : vector<2x1xf32> to vector<1x2x1xf32>
      %cst_17 = arith.constant dense<0.000000e+00> : vector<1xf32>
      %38 = vector.multi_reduction <add>, %37, %cst_17 [1, 2] : vector<1x2x1xf32> to vector<1xf32>
      %39 = vector.shape_cast %38 : vector<1xf32> to vector<1x1x1xf32>
      %40 = vector.extract %39[0, 0, 0] : f32 from vector<1x1x1xf32>
      %cst_18 = arith.constant 2.000000e+00 : f32
      %41 = arith.divf %40, %cst_18 : f32
      %42 = vector.broadcast %41 : f32 to vector<1x1xf32>
      %c0_19 = arith.constant 0 : index
      %c0_20 = arith.constant 0 : index
      %43 = vector.load %arg3[%c0_19, %c0_20] : memref<1x1xf32, #tpu.memory_space<vmem>>, vector<1x1xf32>
      tpu.vector_store %arg3[%c0_19, %c0_20], %42 {strides = array<i32>} : memref<1x1xf32, #tpu.memory_space<vmem>>, vector<1x1xf32>,
    } else {
    }
    return
  }
  func.func @transform_0(%arg0: i32) -> (i32, i32) {
    %c0_i32 = arith.constant 0 : i32
    %c0_i32_0 = arith.constant 0 : i32
    return %c0_i32, %arg0 : i32, i32
  }
  func.func @transform_1(%arg0: i32) -> (i32, i32) {
    %c0_i32 = arith.constant 0 : i32
    %c0_i32_0 = arith.constant 0 : i32
    return %arg0, %c0_i32 : i32, i32
  }
  func.func @transform_2(%arg0: i32) -> (i32, i32) {
    %c0_i32 = arith.constant 0 : i32
    %c0_i32_0 = arith.constant 0 : i32
    %c0_i32_1 = arith.constant 0 : i32
    return %c0_i32, %c0_i32_0 : i32, i32
  }
}

</mosaic_0001>

<llo_original>
// kernel: tpu_custom_call.1
$region0: #{tpu_custom_call.1}
  #allocation0 [shape = 'u32[]', space=smem, size = 0x4, offset = 0x4, fixed_abs, tag = 'smem constant byte address 0x4 - core index']
  #allocation1 [shape = 'u32[144,128]{1,0:T(1,128)}', space=vmem, size = 0x12000, scoped, tag = 'internal scratch']
  #allocation2 [shape = 'f32[4,128]{1,0:T(4,128)}', space=vmem, size = 0x800, scoped, tag = 'scratch operand']
  %s0 = inlined_call_operand.hbm [shape: f32[4,768], index: 0, kind: input, shape index: {}]
  %s1 = inlined_call_operand.hbm [shape: f32[768,128], index: 1, kind: input, shape index: {}]
  %s2 = inlined_call_operand.hbm [shape: f32[1,1], index: 2, kind: output, shape index: {}]
  %s3 = sld [smem:[#allocation0]]
  $region57: #{tpu_custom_call.1} parent=0
    _
  %s5 = ssub.s32 1, %s3
  %s6 = scalar_select 0, %s5, %s3
  $region1: #{tpu_custom_call.1} parent=0
    #allocation3 [shape = 'u8[8192]{0}', space=vmem, size = 0x2000, scoped, tag = 'input window, operand 0']
    #allocation4 [shape = 's32[2]{0}', space=sflag, size = 0x8, scoped, tag = 'scoped memory for tpu_custom_call.1']
    #allocation5 [shape = 's32[2]{0}', space=sflag, size = 0x8, scoped, tag = 'scoped memory for tpu_custom_call.1']
    #allocation6 [shape = 'u8[262144]{0}', space=vmem, size = 0x40000, scoped, tag = 'input window, operand 1']
    #allocation7 [shape = 's32[2]{0}', space=sflag, size = 0x8, scoped, tag = 'scoped memory for tpu_custom_call.1']
    #allocation8 [shape = 'u8[512]{0}', space=vmem, size = 0x400, scoped, tag = 'output window, operand 0, single buffered']
    %7 = vsyncpa [#allocation4], 0
    %s8 = scalar_lea.sflag [#allocation4], 1
    %9 = vsyncpa %s8, 0
    %10 = vsyncpa [#allocation7], 0
    %s11 = scalar_lea.sflag [#allocation7], 1
    %12 = vsyncpa %s11, 0
    %13 = vsyncpa [#allocation5], 0
    loop: start=0, step=1, limit=5
    $region2: #{tpu_custom_call.1} parent=1 // loop_pre_header
      _
    $region3: #{tpu_custom_call.1} parent=1 // loop_header
      %s15 = sphi 0, %s19
      %p16 = scmp.ge.s32.totalorder %s15, 5
      %s25 = sphi 0, %s27
      %s28 = sphi 0, %s25
      %s29 = sphi 0, %s28
      %s45 = sphi 0, %s29
      %s51 = sphi 0, %s53
      %s54 = sphi 0, %s51
      %s55 = sphi 0, %s54
      %s71 = sphi 0, %s55
      %s75 = sphi 0, %s75
      %s77 = sphi 0, %s75
      %s78 = sphi 0, %s77
      %s92 = sphi 0, %s78
    $region4: #{tpu_custom_call.1} parent=1 // loop_header_branch
      %18 = sbr.rel (%p16) target = $region8
    $region5: #{tpu_custom_call.1} parent=1 // loop_body
      %s20 = ssub.s32 %s15, 1
      %s21 = ssub.s32 %s15, 2
      %s22 = sadd.s32 %s15, 1
      %s23 = ssub.s32 %s15, %s22
      %p24 = scmp.eq.s32.totalorder %s23, 0
      %s26 = sadd.s32 %s25, 1
      %s27 = scalar_select %p24, %s25, %s26
      %p30 = pneg %p24
      %p31 = scmp.eq.s32.totalorder %s15, 2
      %p32 = por %p30, %p31
      %p33 = scmp.ne.s32.totalorder %s25, %s28
      %p34 = scmp.eq.s32.totalorder %s15, 0
      %p35 = por %p33, %p34
      %p36 = scmp.ne.s32.totalorder %s25, %s28
      %p37 = scmp.eq.s32.totalorder %s20, 2
      %p38 = por %p36, %p37
      %p39 = scmp.ne.s32.totalorder %s28, %s29
      %p40 = scmp.eq.s32.totalorder %s20, 0
      %p41 = por %p39, %p40
      %p42 = scmp.ne.s32.totalorder %s28, %s29
      %p43 = scmp.eq.s32.totalorder %s21, 2
      %p44 = por %p42, %p43
      %p46 = scmp.ne.s32.totalorder %s29, %s45
      %p47 = scmp.eq.s32.totalorder %s21, 0
      %p48 = por %p46, %p47
      %s49 = ssub.s32 %s15, %s22
      %p50 = scmp.eq.s32.totalorder %s49, 0
      %s52 = sadd.s32 %s51, 1
      %s53 = scalar_select %p50, %s51, %s52
      %p56 = pneg %p50
      %p57 = scmp.eq.s32.totalorder %s15, 2
      %p58 = por %p56, %p57
      %p59 = scmp.ne.s32.totalorder %s51, %s54
      %p60 = scmp.eq.s32.totalorder %s15, 0
      %p61 = por %p59, %p60
      %p62 = scmp.ne.s32.totalorder %s51, %s54
      %p63 = scmp.eq.s32.totalorder %s20, 2
      %p64 = por %p62, %p63
      %p65 = scmp.ne.s32.totalorder %s54, %s55
      %p66 = scmp.eq.s32.totalorder %s20, 0
      %p67 = por %p65, %p66
      %p68 = scmp.ne.s32.totalorder %s54, %s55
      %p69 = scmp.eq.s32.totalorder %s21, 2
      %p70 = por %p68, %p69
      %p72 = scmp.ne.s32.totalorder %s55, %s71
      %p73 = scmp.eq.s32.totalorder %s21, 0
      %p74 = por %p72, %p73
      %s76 = sadd.s32 %s75, 1
      %p79 = scmp.eq.s32.totalorder %s15, 2
      %p80 = scmp.ne.s32.totalorder %s75, %s77
      %p81 = scmp.eq.s32.totalorder %s15, 0
      %p82 = por %p80, %p81
      %p83 = scmp.ne.s32.totalorder %s75, %s77
      %p84 = scmp.eq.s32.totalorder %s20, 2
      %p85 = por %p83, %p84
      %p86 = scmp.ne.s32.totalorder %s77, %s78
      %p87 = scmp.eq.s32.totalorder %s20, 0
      %p88 = por %p86, %p87
      %p89 = scmp.ne.s32.totalorder %s77, %s78
      %p90 = scmp.eq.s32.totalorder %s21, 2
      %p91 = por %p89, %p90
      %p93 = scmp.ne.s32.totalorder %s78, %s92
      %p94 = scmp.eq.s32.totalorder %s21, 0
      %p95 = por %p93, %p94
      %p96 = scmp.le.s32.totalorder 1, %s15
      %p97 = scmp.lt.s32.totalorder %s15, 4
      %p98 = pnand %p96, %p97
      %p99 = pneg %p98
      // Predicated region
      $region9: #{tpu_custom_call.1} parent=5 // pred_check
        _
      $region10: #{tpu_custom_call.1} parent=5 // pred_check_branch
        %101 = sbr.rel (%p98) target = $region12
      $region11: #{tpu_custom_call.1} parent=5 // pred_region
        %s102 = ssub.s32 %s15, 1
      $region12: #{tpu_custom_call.1} parent=5 // pred_fallthru
        _
      %p103 = scmp.lt.s32.totalorder %s15, 3
      // Predicated region
      $region13: #{tpu_custom_call.1} parent=5 // pred_check
        %p104 = pneg %p103
      $region14: #{tpu_custom_call.1} parent=5 // pred_check_branch
        %106 = sbr.rel (%p104) target = $region16
      $region15: #{tpu_custom_call.1} parent=5 // pred_region
        // Predicated region
        $region17: #{tpu_custom_call.1} parent=15 // pred_check
          %p107 = pneg %p35
        $region18: #{tpu_custom_call.1} parent=15 // pred_check_branch
          %109 = sbr.rel (%p107) target = $region20
        $region19: #{tpu_custom_call.1} parent=15 // pred_region
          %s110 = sand.u32 %s25, 1
          %s111 = scalar_lea.sflag [#allocation4], %s110
          %s112 = sand.u32 %s25, 1
          %s113 = smul.addr %s112, 8
          %s114 = scalar_lea.vmem [#allocation3], %s113
          %s115 = smul.u32 2, %s15
          %s117 = ssub.s32 128, 128
          %118 = vsyncadd %s111, %s117
          %s119 = smul.addr %s115, 64
          %s120 = scalar_lea.hbm %s0, %s119
          %s122 = sshll.u32 %s114, 4
          %s123 = int_to_ptr.vmem [resolvable:$true] %s122
          %125 = dma.hbm_to_vmem [thread:$0]  %s120, 128, %s123, %s111
        $region20: #{tpu_custom_call.1} parent=15 // pred_fallthru
          _
        // Predicated region
        $region21: #{tpu_custom_call.1} parent=15 // pred_check
          %p126 = pneg %p61
        $region22: #{tpu_custom_call.1} parent=15 // pred_check_branch
          %128 = sbr.rel (%p126) target = $region24
        $region23: #{tpu_custom_call.1} parent=15 // pred_region
          %s129 = sand.u32 %s51, 1
          %s130 = scalar_lea.sflag [#allocation7], %s129
          %s131 = sand.u32 %s51, 1
          %s132 = smul.addr %s131, 256
          %s133 = scalar_lea.vmem [#allocation6], %s132
          %s134 = smul.u32 32, %s15
          %s136 = ssub.s32 4096, 4096
          %137 = vsyncadd %s130, %s136
          %s138 = smul.addr %s134, 128
          %s139 = scalar_lea.hbm %s1, %s138
          %s140 = sshll.u32 %s133, 4
          %s141 = int_to_ptr.vmem [resolvable:$true] %s140
          %146 = dma.hbm_to_vmem [thread:$0]  %s139, 4096, %s141, %s130, 128, 128, 8
        $region24: #{tpu_custom_call.1} parent=15 // pred_fallthru
          _
      $region16: #{tpu_custom_call.1} parent=5 // pred_fallthru
        _
      %p147 = scmp.le.s32.totalorder 1, %s15
      %p148 = scmp.lt.s32.totalorder %s15, 4
      %p149 = pnand %p147, %p148
      %p150 = pneg %p149
      // Predicated region
      $region25: #{tpu_custom_call.1} parent=5 // pred_check
        _
      $region26: #{tpu_custom_call.1} parent=5 // pred_check_branch
        %152 = sbr.rel (%p149) target = $region28
      $region27: #{tpu_custom_call.1} parent=5 // pred_region
        %s153 = ssub.s32 %s15, 1
        %s154 = sand.u32 %s28, 1
        %s155 = scalar_lea.sflag [#allocation4], %s154
        %s156 = sand.u32 %s28, 1
        %s157 = smul.addr %s156, 8
        %s158 = scalar_lea.vmem [#allocation3], %s157
        // Predicated region
        $region29: #{tpu_custom_call.1} parent=27 // pred_check
          %p159 = pneg %p41
        $region30: #{tpu_custom_call.1} parent=27 // pred_check_branch
          %161 = sbr.rel (%p159) target = $region32
        $region31: #{tpu_custom_call.1} parent=27 // pred_region
          %162 = dma.done %s155, 128
        $region32: #{tpu_custom_call.1} parent=27 // pred_fallthru
          _
        %s163 = sand.u32 %s54, 1
        %s164 = scalar_lea.sflag [#allocation7], %s163
        %s165 = sand.u32 %s54, 1
        %s166 = smul.addr %s165, 256
        %s167 = scalar_lea.vmem [#allocation6], %s166
        // Predicated region
        $region33: #{tpu_custom_call.1} parent=27 // pred_check
          %p168 = pneg %p67
        $region34: #{tpu_custom_call.1} parent=27 // pred_check_branch
          %170 = sbr.rel (%p168) target = $region36
        $region35: #{tpu_custom_call.1} parent=27 // pred_region
          %171 = dma.done %s164, 4096
        $region36: #{tpu_custom_call.1} parent=27 // pred_fallthru
          _
        %s172 = sand.u32 %s28, 1
        %s173 = scalar_lea.sflag [#allocation4], %s172
        %s174 = sand.u32 %s28, 1
        %s175 = smul.addr %s174, 8
        %s176 = scalar_lea.vmem [#allocation3], %s175
        %p177 = pneg %p41
        %p178 = pneg %p38
        %s179 = sand.u32 %s54, 1
        %s180 = scalar_lea.sflag [#allocation7], %s179
        %s181 = sand.u32 %s54, 1
        %s182 = smul.addr %s181, 256
        %s183 = scalar_lea.vmem [#allocation6], %s182
        %p184 = pneg %p67
        %p185 = pneg %p64
        %p186 = pneg %p88
        %p187 = pneg %p85
        %s188 = smul.u32 2, %s20
        %s189 = smul.u32 32, %s20
        %p190 = scmp.eq.s32.totalorder %s20, 0
        // Predicated region
        $region37: #{tpu_custom_call.1} parent=27 // pred_check
          %p191 = pneg %p190
        $region38: #{tpu_custom_call.1} parent=27 // pred_check_branch
          %193 = sbr.rel (%p191) target = $region40
        $region39: #{tpu_custom_call.1} parent=27 // pred_region
          %194 = vst [vmem:[#allocation2] sm:$0xf] 0.0
        $region40: #{tpu_custom_call.1} parent=27 // pred_fallthru
          _
        %v195 = vld [vmem:[#allocation2] sm:$0xf]
        %v196 = vld [vmem:[%s158] sm:$0xff]
        %v197 = vld [vmem:[%s167] sm:$0xff]
        %v198 = vld [vmem:[%s167 + $0x8] sm:$0xff]
        %v199 = vld [vmem:[%s167 + $0x10] sm:$0xff]
        %v200 = vld [vmem:[%s167 + $0x18] sm:$0xff]
        %v201 = vld [vmem:[%s167 + $0x20] sm:$0xff]
        %v202 = vld [vmem:[%s167 + $0x28] sm:$0xff]
        %v203 = vld [vmem:[%s167 + $0x30] sm:$0xff]
        %v204 = vld [vmem:[%s167 + $0x38] sm:$0xff]
        %v205 = vld [vmem:[%s167 + $0x40] sm:$0xff]
        %v206 = vld [vmem:[%s167 + $0x48] sm:$0xff]
        %v207 = vld [vmem:[%s167 + $0x50] sm:$0xff]
        %v208 = vld [vmem:[%s167 + $0x58] sm:$0xff]
        %v209 = vld [vmem:[%s167 + $0x60] sm:$0xff]
        %v210 = vld [vmem:[%s167 + $0x68] sm:$0xff]
        %v211 = vld [vmem:[%s167 + $0x70] sm:$0xff]
        %v212 = vld [vmem:[%s167 + $0x78] sm:$0xff]
        %v213 = vld [vmem:[%s167 + $0x80] sm:$0xff]
        %v214 = vld [vmem:[%s167 + $0x88] sm:$0xff]
        %v215 = vld [vmem:[%s167 + $0x90] sm:$0xff]
        %v216 = vld [vmem:[%s167 + $0x98] sm:$0xff]
        %v217 = vld [vmem:[%s167 + $0xa0] sm:$0xff]
        %v218 = vld [vmem:[%s167 + $0xa8] sm:$0xff]
        %v219 = vld [vmem:[%s167 + $0xb0] sm:$0xff]
        %v220 = vld [vmem:[%s167 + $0xb8] sm:$0xff]
        %v221 = vld [vmem:[%s167 + $0xc0] sm:$0xff]
        %v222 = vld [vmem:[%s167 + $0xc8] sm:$0xff]
        %v223 = vld [vmem:[%s167 + $0xd0] sm:$0xff]
        %v224 = vld [vmem:[%s167 + $0xd8] sm:$0xff]
        %v225 = vld [vmem:[%s167 + $0xe0] sm:$0xff]
        %v226 = vld [vmem:[%s167 + $0xe8] sm:$0xff]
        %v227 = vld [vmem:[%s167 + $0xf0] sm:$0xff]
        %v228 = vld [vmem:[%s167 + $0xf8] sm:$0xff]
        %v230 = vcombine.high %v196, %v196
        %232 = vmatprep.subr.mxu0 0.0
        %233 = vmatpush1.msra.mxu0 %v197
        %234 = vmatprep.subr.mxu0 0.0
        %235 = vmatpush1.msra.mxu0 %v198
        %236 = vmatprep.subr.mxu0 0.0
        %237 = vmatpush1.msra.mxu0 %v199
        %238 = vmatprep.subr.mxu0 0.0
        %239 = vmatpush1.msra.mxu0 %v200
        %240 = vmatprep.subr.mxu0 0.0
        %241 = vmatpush1.msra.mxu0 %v201
        %242 = vmatprep.subr.mxu0 0.0
        %243 = vmatpush1.msra.mxu0 %v202
        %244 = vmatprep.subr.mxu0 0.0
        %245 = vmatpush1.msra.mxu0 %v203
        %246 = vmatprep.subr.mxu0 0.0
        %247 = vmatpush1.msra.mxu0 %v204
        %248 = vmatprep.subr.mxu0 0.0
        %249 = vmatpush1.msra.mxu0 %v205
        %250 = vmatprep.subr.mxu0 0.0
        %251 = vmatpush1.msra.mxu0 %v206
        %252 = vmatprep.subr.mxu0 0.0
        %253 = vmatpush1.msra.mxu0 %v207
        %254 = vmatprep.subr.mxu0 0.0
        %255 = vmatpush1.msra.mxu0 %v208
        %256 = vmatprep.subr.mxu0 0.0
        %257 = vmatpush1.msra.mxu0 %v209
        %258 = vmatprep.subr.mxu0 0.0
        %259 = vmatpush1.msra.mxu0 %v210
        %260 = vmatprep.subr.mxu0 0.0
        %261 = vmatpush1.msra.mxu0 %v211
        %262 = vmatprep.subr.mxu0 0.0
        %263 = vmatpush1.msra.mxu0 %v212
        %264 = vmatprep.subr.mxu0 0.0
        %265 = vmatpush1.msra.mxu0 %v213
        %266 = vmatprep.subr.mxu0 0.0
        %267 = vmatpush1.msra.mxu0 %v214
        %268 = vmatprep.subr.mxu0 0.0
        %269 = vmatpush1.msra.mxu0 %v215
        %270 = vmatprep.subr.mxu0 0.0
        %271 = vmatpush1.msra.mxu0 %v216
        %272 = vmatprep.subr.mxu0 0.0
        %273 = vmatpush1.msra.mxu0 %v217
        %274 = vmatprep.subr.mxu0 0.0
        %275 = vmatpush1.msra.mxu0 %v218
        %276 = vmatprep.subr.mxu0 0.0
        %277 = vmatpush1.msra.mxu0 %v219
        %278 = vmatprep.subr.mxu0 0.0
        %279 = vmatpush1.msra.mxu0 %v220
        %280 = vmatprep.subr.mxu0 0.0
        %281 = vmatpush1.msra.mxu0 %v221
        %282 = vmatprep.subr.mxu0 0.0
        %283 = vmatpush1.msra.mxu0 %v222
        %284 = vmatprep.subr.mxu0 0.0
        %285 = vmatpush1.msra.mxu0 %v223
        %286 = vmatprep.subr.mxu0 0.0
        %287 = vmatpush1.msra.mxu0 %v224
        %288 = vmatprep.subr.mxu0 0.0
        %289 = vmatpush1.msra.mxu0 %v225
        %290 = vmatprep.subr.mxu0 0.0
        %291 = vmatpush1.msra.mxu0 %v226
        %292 = vmatprep.subr.mxu0 0.0
        %293 = vmatpush1.msra.mxu0 %v227
        %294 = vmatprep.subr.mxu0 0.0
        %295 = vmatpush1.msra.mxu0 %v228
        %296 = vmatprep.mubr.f32.mxu0 %v230
        %297 = vmatmul.mubr.f32.gmra.mrb[0].mxu0 %v196
        %v298 = vpop.f32.mrb[0].mxu0
        %v299 = vadd.f32 0.0, %v298
        %v300 = vpop.f32.mrb[0].mxu0
        %301 = vdwg.mxu0
        %v302 = vadd.f32 %v195, %v299
        %303 = vst [vmem:[#allocation2] sm:$0xf] %v302
        %p304 = scmp.eq.s32.totalorder %s20, 2
        // Predicated region
        $region41: #{tpu_custom_call.1} parent=27 // pred_check
          %p305 = pneg %p304
        $region42: #{tpu_custom_call.1} parent=27 // pred_check_branch
          %307 = sbr.rel (%p305) target = $region44
        $region43: #{tpu_custom_call.1} parent=27 // pred_region
          %v308 = vld [vmem:[#allocation2] sm:$0xf]
          %v309 = vmul.f32 %v308, %v308
          %vm310 = vcmask 1041408
          %v311 = vsel %vm310, %v309, 0.0
          %312 = vadd.xlane.f32.xlu0 %v311
          %v313 = vpop.xlane.xlu0 %312
          %v314 = vrsqrt.pop %v313
          %v315 = vmul.f32 %v313, %v314
          %vm316 = vcmp.eq.f32.partialorder %v313, inf
          %v317 = vsel %vm316, %v313, %v315
          %vm318 = vcmp.eq.f32.partialorder %v313, 0.0
          %v319 = vand.u32 %v313, 2147483648
          %v320 = vsel %vm318, %v319, %v317
          %v321 = vmax.f32 %v320, 1e-12
          %vm322 = vcmask 1043458
          %v323 = vsel %vm322, %v309, 0.0
          %324 = vadd.xlane.f32.xlu0 %v323
          %v325 = vpop.xlane.xlu0 %324
          %v326 = vrsqrt.pop %v325
          %v327 = vmul.f32 %v325, %v326
          %vm328 = vcmp.eq.f32.partialorder %v325, inf
          %v329 = vsel %vm328, %v325, %v327
          %vm330 = vcmp.eq.f32.partialorder %v325, 0.0
          %v331 = vand.u32 %v325, 2147483648
          %v332 = vsel %vm330, %v331, %v329
          %v333 = vmax.f32 %v332, 1e-12
          %v334 = vrcp.pop %v321
          %v335 = vmul.f32 %v308, %v334
          %v336 = vrcp.pop %v333
          %v337 = vmul.f32 %v308, %v336
          %v339 = vrot.slane %v337, 2
          %v341 = vmul.f32 %v335, %v339
          %v342 = vsel %vm310, %v341, 0.0
          %343 = vadd.xlane.f32.xlu0 %v342
          %v344 = vpop.xlane.xlu0 %343
          %v345 = vsub.f32 1.0, %v344
          %v346 = vand.u32 2147483647, %v345
          %vm347 = vcmask 1024
          %v348 = vsel %vm347, %v346, 0.0
          %349 = vadd.xlane.f32.xlu0 %v348
          %v350 = vpop.xlane.xlu0 %349
          %v351 = vrot.slane %v350, 4
          %v352 = vadd.f32 %v350, %v351
          %v353 = vrot.slane %v352, 2
          %v354 = vadd.f32 %v352, %v353
          %v355 = vrot.slane %v354, 1
          %v356 = vadd.f32 %v354, %v355
          %s357 = vtos %v356
          %v358 = vrcp.pop 2.0
          %s359 = vtos %v358
          %s360 = smul.f32 %s357, %s359
          %v361 = vstv %s360
          %vm362 = vcmask 0
          %363 = vst.msk [vmem:[#allocation8] sm:$0x1] %vm362, %v361
        $region44: #{tpu_custom_call.1} parent=27 // pred_fallthru
          _
        // Predicated region
        $region45: #{tpu_custom_call.1} parent=27 // pred_check
          %p364 = pneg %p85
        $region46: #{tpu_custom_call.1} parent=27 // pred_check_branch
          %366 = sbr.rel (%p364) target = $region48
        $region47: #{tpu_custom_call.1} parent=27 // pred_region
          %s368 = ssub.s32 16, 16
          %369 = vsyncadd [#allocation5], %s368
          %s371 = sshll.u32 [#allocation8], 4
          %s372 = int_to_ptr.vmem [resolvable:$true] %s371
          %374 = dma.vmem_to_hbm [thread:$0]  %s372, 16, %s2, [#allocation5]
        $region48: #{tpu_custom_call.1} parent=27 // pred_fallthru
          _
        // Predicated region
        $region49: #{tpu_custom_call.1} parent=27 // pred_check
          %p375 = pneg %p85
        $region50: #{tpu_custom_call.1} parent=27 // pred_check_branch
          %377 = sbr.rel (%p375) target = $region52
        $region51: #{tpu_custom_call.1} parent=27 // pred_region
          %378 = dma.done [#allocation5], 16
        $region52: #{tpu_custom_call.1} parent=27 // pred_fallthru
          _
      $region28: #{tpu_custom_call.1} parent=5 // pred_fallthru
        _
      %p379 = scmp.le.s32.totalorder 2, %s15
      // Predicated region
      $region53: #{tpu_custom_call.1} parent=5 // pred_check
        %p380 = pneg %p379
      $region54: #{tpu_custom_call.1} parent=5 // pred_check_branch
        %382 = sbr.rel (%p380) target = $region56
      $region55: #{tpu_custom_call.1} parent=5 // pred_region
        %s383 = ssub.s32 %s15, 2
      $region56: #{tpu_custom_call.1} parent=5 // pred_fallthru
        _
    $region6: #{tpu_custom_call.1} parent=1 // loop_footer
      %s19 = sadd.s32 1, %s15
    $region7: #{tpu_custom_call.1} parent=1 // loop_footer_branch
      %14 = sbr.rel target = $region3
    $region8: #{tpu_custom_call.1} parent=1 // loop_exit
      _
    %384 = vsyncpa [#allocation4], 1
    %s385 = scalar_lea.sflag [#allocation4], 1
    %386 = vsyncpa %s385, 1
    %387 = vsyncpa [#allocation7], 1
    %s388 = scalar_lea.sflag [#allocation7], 1
    %389 = vsyncpa %s388, 1
    %390 = vsyncpa [#allocation5], 1
    %s391 = scalar_lea.sflag [#allocation5], 1
    %392 = vsyncpa %s391, 1

</llo_original>
